<compile_context>
chip_gen: v7x
topology: tpu7x:2x2x1
jax: 0.10.0
libtpu: 0.0.40
codegen_flags: <defaults>
</compile_context>

<pallas_src>
import functools

import jax
import jax.numpy as jnp
from jax.experimental import pallas as pl
from jax.experimental.pallas import tpu as pltpu

_EPS = 1e-5


# --------------------------------------------------------------------------
# small in-kernel helpers
# --------------------------------------------------------------------------

def _layer_norm(x, g, b, eps):
    mu = jnp.mean(x, axis=-1, keepdims=True)
    var = jnp.mean((x - mu) ** 2, axis=-1, keepdims=True)
    return (x - mu) * jax.lax.rsqrt(var + eps) * g + b


# --------------------------------------------------------------------------
# fused input projection: LN -> Linear -> ReLU -> LN -> Linear -> + tok_emb
# (weights arrive as bf16; activations cast once per matmul, accumulate in f32)
# --------------------------------------------------------------------------

def _proj_kernel(x_ref, g1_ref, be1_ref, w1_ref, b1_ref,
                 g2_ref, be2_ref, w2_ref, b2_ref, tok_ref, o_ref, *, eps):
    x = x_ref[...].astype(jnp.float32)                       # (TM, Din)
    h = _layer_norm(x, g1_ref[...], be1_ref[...], eps)
    h = jnp.dot(h.astype(jnp.bfloat16), w1_ref[...],
                preferred_element_type=jnp.float32) + b1_ref[...]
    h = jnp.maximum(h, 0.0)
    h = _layer_norm(h, g2_ref[...], be2_ref[...], eps)
    h = jnp.dot(h.astype(jnp.bfloat16), w2_ref[...],
                preferred_element_type=jnp.float32) + b2_ref[...]
    o_ref[...] = h + tok_ref[...]                            # token-type embedding


def project(x, p1, p2, tok_row, *, eps=_EPS):
    """Both LinearLayer stages + tok_emb in one kernel; (B, L) flattened to rows."""
    B, L, Din = x.shape
    Dmid = p1["w"].shape[1]
    Dout = p2["w"].shape[1]
    rows = B * L
    tm = min(rows, 512)                                       # ~85% HBM roofline tile
    x2 = x.reshape(rows, Din)
    kernel = functools.partial(_proj_kernel, eps=eps)
    out = pl.pallas_call(
        kernel,
        out_shape=jax.ShapeDtypeStruct((rows, Dout), jnp.float32),
        grid=(pl.cdiv(rows, tm),),
        in_specs=[
            pl.BlockSpec((tm, Din), lambda i: (i, 0)),
            pl.BlockSpec((1, Din), lambda i: (0, 0)),
            pl.BlockSpec((1, Din), lambda i: (0, 0)),
            pl.BlockSpec((Din, Dmid), lambda i: (0, 0)),      # bf16, resident
            pl.BlockSpec((1, Dmid), lambda i: (0, 0)),
            pl.BlockSpec((1, Dmid), lambda i: (0, 0)),
            pl.BlockSpec((1, Dmid), lambda i: (0, 0)),
            pl.BlockSpec((Dmid, Dout), lambda i: (0, 0)),     # bf16, resident
            pl.BlockSpec((1, Dout), lambda i: (0, 0)),
            pl.BlockSpec((1, Dout), lambda i: (0, 0)),
        ],
        out_specs=pl.BlockSpec((tm, Dout), lambda i: (i, 0)),
        compiler_params=pltpu.CompilerParams(dimension_semantics=("parallel",)),
    )(x2, p1["g"], p1["beta"], p1["w"], p1["b"],
      p2["g"], p2["beta"], p2["w"], p2["b"], tok_row)
    return out.reshape(B, L, Dout)


# --------------------------------------------------------------------------
# encoder: depth x Block (fused add + LayerNorm, prenorm, residual_in_fp32)
# + trailing norm_f, all inside one kernel body via an unrolled fori_loop.
# hidden/residual are loop carries (VMEM/vreg resident), no scratch, no
# per-layer grid-step overhead or per-layer gamma/beta DMAs.
# --------------------------------------------------------------------------

def _encoder_kernel(src_ref, pos_ref, g_ref, b_ref, o_ref, *, eps, depth):
    pos = pos_ref[0]                                          # (L, H) f32
    hid0 = src_ref[0].astype(jnp.float32)
    res0 = jnp.zeros_like(hid0)

    def body(i, carry):
        hid, res = carry
        # Block.forward (fused_add_norm, prenorm):
        #   residual = hidden + residual ; hidden = LN(residual)*g + b + pos ; mixer
        res = res + hid
        g = g_ref[pl.ds(i, 1), :]
        be = b_ref[pl.ds(i, 1), :]
        xn = _layer_norm(res, g, be, eps)
        # TODO(synk): the ViM/DBM Mamba mixer (mamba_ssm selective scan) is not
        # defined in the reference snippet; the mixer is treated as identity.
        hid = xn + pos
        return hid, res

    hid, res = jax.lax.fori_loop(0, depth, body, (hid0, res0), unroll=True)

    # trailing norm_f: final add + LayerNorm (no positional embedding / mixer)
    res = res + hid
    o_ref[0] = _layer_norm(res, g_ref[pl.ds(depth, 1), :],
                           b_ref[pl.ds(depth, 1), :], eps)


def encoder(src, pos, gammas, betas, *, eps=_EPS):
    B, L, H = src.shape
    n_steps = gammas.shape[0]                                 # depth + 1 (incl. norm_f)
    kernel = functools.partial(_encoder_kernel, eps=eps, depth=n_steps - 1)
    return pl.pallas_call(
        kernel,
        out_shape=jax.ShapeDtypeStruct((B, L, H), jnp.float32),
        grid=(B,),
        in_specs=[
            pl.BlockSpec((1, L, H), lambda b: (b, 0, 0)),
            pl.BlockSpec((1, L, H), lambda b: (b, 0, 0)),
            pl.BlockSpec((n_steps, H), lambda b: (0, 0)),     # all-layer gammas
            pl.BlockSpec((n_steps, H), lambda b: (0, 0)),     # all-layer betas
        ],
        out_specs=pl.BlockSpec((1, L, H), lambda b: (b, 0, 0)),
        compiler_params=pltpu.CompilerParams(dimension_semantics=("parallel",)),
    )(src, pos, gammas, betas)


# --------------------------------------------------------------------------
# prediction heads: two 3-layer Conv1d (k=3, pad=1) heads fused in one kernel.
# (B*L) rows flattened; taps concatenated on lanes -> one wide-K matmul per conv;
# final layer computed transposed (dot_general q@k^T pattern) so the 1/2-channel
# outputs are stored lane-dense; sigmoid and the span [-1,+1] scale fused in.
# --------------------------------------------------------------------------

def _heads_kernel(x_ref,
                  cw1_ref, cb1_ref, cw2_ref, cb2_ref, cw3t_ref, cb3t_ref,
                  sw1_ref, sb1_ref, sw2_ref, sb2_ref, sw3t_ref, sb3t_ref,
                  scale_ref, cls_ref, span_ref, *, L, rows):
    x = x_ref[...].astype(jnp.float32)                        # (rows, Din)

    # per-sequence boundary masks (rows = B*L flattened): zero the cross-boundary
    # taps so the flattened roll matches zero-padded per-sequence conv1d.
    pos = jax.lax.broadcasted_iota(jnp.int32, (rows, 1), 0) % L
    not_first = (pos > 0).astype(jnp.float32)
    not_last = (pos < L - 1).astype(jnp.float32)

    def cat_taps(v):                                          # (rows, D) -> (rows, 3D) bf16
        prev = pltpu.roll(v, shift=1, axis=0) * not_first     # v[l-1], zero at l=0
        nxt = pltpu.roll(v, shift=rows - 1, axis=0) * not_last  # v[l+1], zero at l=L-1
        return jnp.concatenate([prev, v, nxt], axis=-1).astype(jnp.bfloat16)

    def conv(cat_bf16, w_ref, b_ref):                         # one wide-K matmul
        return jnp.dot(cat_bf16, w_ref[...],
                       preferred_element_type=jnp.float32) + b_ref[...]

    x_cat = cat_taps(x)                                       # shared by both heads
    dn = (((1,), (1,)), ((), ()))                             # contract lane dims

    def head_T(w1, b1, w2, b2, w3t, b3t):
        y = jnp.maximum(conv(x_cat, w1, b1), 0.0)
        y = jnp.maximum(conv(cat_taps(y), w2, b2), 0.0)
        cat = cat_taps(y)                                     # (rows, 3*Dh) bf16
        # transposed final layer: (Dout, 3*Dh) x (rows, 3*Dh)^T -> (Dout, rows)
        yT = jax.lax.dot_general(w3t[...], cat, dn,
                                 preferred_element_type=jnp.float32)
        return yT + b3t[...]

    cls_ref[...] = jax.nn.sigmoid(
        head_T(cw1_ref, cb1_ref, cw2_ref, cb2_ref, cw3t_ref, cb3t_ref))
    span = jax.nn.sigmoid(
        head_T(sw1_ref, sb1_ref, sw2_ref, sb2_ref, sw3t_ref, sb3t_ref))
    span_ref[...] = span * scale_ref[...]                     # idx_mask = [-1, +1]


def prediction_heads(x, class_p, span_p):
    B, L, Din = x.shape
    Dc = class_p["w3t"].shape[0]
    Ds = span_p["w3t"].shape[0]
    rows = B * L
    x2 = x.reshape(rows, Din)
    scale = jnp.array([[-1.0], [1.0]], jnp.float32)           # (Ds, 1) span idx_mask

    weights = (class_p["w1"], class_p["b1"], class_p["w2"], class_p["b2"],
               class_p["w3t"], class_p["b3t"],
               span_p["w1"], span_p["b1"], span_p["w2"], span_p["b2"],
               span_p["w3t"], span_p["b3t"])

    kernel = functools.partial(_heads_kernel, L=L, rows=rows)
    # TODO(synk): at large B*L, tile the row axis with halo handling for the rolls.
    cls_t, span_t = pl.pallas_call(
        kernel,
        out_shape=(jax.ShapeDtypeStruct((Dc, rows), jnp.float32),
                   jax.ShapeDtypeStruct((Ds, rows), jnp.float32)),
        grid=(1,),
        in_specs=[pl.BlockSpec((rows, Din), lambda i: (0, 0))]
                 + [pl.BlockSpec(a.shape, lambda i: (0, 0)) for a in weights]
                 + [pl.BlockSpec((Ds, 1), lambda i: (0, 0))],
        out_specs=(pl.BlockSpec((Dc, rows), lambda i: (0, 0)),
                   pl.BlockSpec((Ds, rows), lambda i: (0, 0))),
        compiler_params=pltpu.CompilerParams(dimension_semantics=("arbitrary",)),
    )(x2, *weights, scale)
    cls = jnp.transpose(cls_t).reshape(B, L, Dc)
    span = jnp.transpose(span_t).reshape(B, L, Ds)
    return cls, span


# --------------------------------------------------------------------------
# fused WeightedPool + saliency cosine similarity (lane-dense saliency store)
# --------------------------------------------------------------------------

def _pool_sim_kernel(t_ref, tm_ref, v_ref, vm_ref, w_ref, pool_ref, sim_ref):
    t = t_ref[0].astype(jnp.float32)                          # (Lt, H)
    tmask = tm_ref[0]                                         # (Lt, 1)
    # alpha via VPU multiply + lane reduction (no 1-column MXU matmul)
    alpha = jnp.sum(t * w_ref[...], axis=-1, keepdims=True)   # (Lt, 1)
    alpha = alpha + (1.0 - tmask) * (-1e30)
    alpha = alpha - jnp.max(alpha, axis=0, keepdims=True)
    e = jnp.exp(alpha)
    a = e * pl.reciprocal(jnp.sum(e, axis=0, keepdims=True), approx=True)
    pooled = jnp.sum(t * a, axis=0, keepdims=True)            # (1, H)
    pool_ref[0] = pooled

    v = v_ref[0].astype(jnp.float32)                          # (Lv, H)
    dn = (((1,), (1,)), ((), ()))                             # contract H vs H
    dot_t = jax.lax.dot_general(pooled, v, dn,
                                preferred_element_type=jnp.float32)        # (1, Lv)
    vnsq_t = jax.lax.dot_general(jnp.ones_like(pooled), v * v, dn,
                                 preferred_element_type=jnp.float32)       # (1, Lv)
    tnsq = jnp.sum(pooled * pooled, axis=-1, keepdims=True)                # (1, 1)
    cos_t = dot_t * jax.lax.rsqrt(vnsq_t * tnsq + 1e-16)                   # (1, Lv)
    sim_ref[0] = cos_t + jnp.log(vm_ref[0] + 1e-45)           # lane-dense store


def pool_and_saliency(txt, txt_mask, vid, vid_mask, w_row):
    B, Lt, H = txt.shape
    _, Lv, _ = vid.shape
    tm = txt_mask.reshape(B, Lt, 1).astype(jnp.float32)
    vm = vid_mask.reshape(B, 1, Lv).astype(jnp.float32)       # lane-dense mask
    pooled, sim = pl.pallas_call(
        _pool_sim_kernel,
        out_shape=(jax.ShapeDtypeStruct((B, 1, H), jnp.float32),
                   jax.ShapeDtypeStruct((B, 1, Lv), jnp.float32)),
        grid=(B,),
        in_specs=[
            pl.BlockSpec((1, Lt, H), lambda b: (b, 0, 0)),
            pl.BlockSpec((1, Lt, 1), lambda b: (b, 0, 0)),
            pl.BlockSpec((1, Lv, H), lambda b: (b, 0, 0)),
            pl.BlockSpec((1, 1, Lv), lambda b: (b, 0, 0)),
            pl.BlockSpec((1, H), lambda b: (0, 0)),
        ],
        out_specs=(pl.BlockSpec((1, 1, H), lambda b: (b, 0, 0)),
                   pl.BlockSpec((1, 1, Lv), lambda b: (b, 0, 0))),
        compiler_params=pltpu.CompilerParams(dimension_semantics=("parallel",)),
    )(txt, tm, vid, vm, w_row)
    return pooled, sim[:, 0, :]


# --------------------------------------------------------------------------
# Parameters (deterministic, synthetic) and glue
# --------------------------------------------------------------------------

def make_params(key, txt_dim, vid_dim, hidden, depth, span_pred_dim=2):
    ks = iter(jax.random.split(key, 32))

    def linlayer(din, dout):
        return dict(
            g=jnp.ones((1, din), jnp.float32),
            beta=jnp.zeros((1, din), jnp.float32),
            # MXU weights pre-cast to bf16 on the host (halves weight DMA bytes)
            w=(0.02 * jax.random.normal(next(ks), (din, dout), jnp.float32)
               ).astype(jnp.bfloat16),
            b=jnp.zeros((1, dout), jnp.float32),
        )

    def conv_head(din, dh, dout):
        def cw(i, o):
            return 0.02 * jax.random.normal(next(ks), (3, i, o), jnp.float32)
        w1, w2, w3 = cw(din, dh), cw(dh, dh), cw(dh, dout)
        return dict(
            # taps concatenated [prev, cur, next] on lanes -> weights (3*Din, Dout)
            w1=w1.reshape(3 * din, dh).astype(jnp.bfloat16),
            b1=jnp.zeros((1, dh), jnp.float32),
            w2=w2.reshape(3 * dh, dh).astype(jnp.bfloat16),
            b2=jnp.zeros((1, dh), jnp.float32),
            # final layer pre-transposed: (Dout, 3*Dh) for the lane-dense path
            w3t=jnp.transpose(w3.reshape(3 * dh, dout)).astype(jnp.bfloat16),
            b3t=jnp.zeros((dout, 1), jnp.float32),
        )

    return dict(
        txt_proj=[linlayer(txt_dim, hidden), linlayer(hidden, hidden)],
        vid_proj=[linlayer(vid_dim, hidden), linlayer(hidden, hidden)],
        tok_emb=0.02 * jax.random.normal(next(ks), (2, hidden), jnp.float32),
        layers_g=jnp.ones((depth, hidden), jnp.float32),      # per-Block LN weight
        layers_b=jnp.zeros((depth, hidden), jnp.float32),
        norm_f_g=jnp.ones((1, hidden), jnp.float32),
        norm_f_b=jnp.zeros((1, hidden), jnp.float32),
        span_embed=conv_head(hidden, hidden, span_pred_dim),
        class_embed=conv_head(hidden, hidden, 1),
        wpool_w=(1.0 / jnp.sqrt(hidden)) * jax.random.normal(
            next(ks), (1, hidden), jnp.float32),
    )


def sine_position_embedding(mask, num_feats, temperature=10000.0):
    # TODO(synk): `position_embed` is an external module passed into the constructor;
    # a deterministic 1D sine positional encoding (UniVTG-style) stands in here.
    x_embed = jnp.cumsum(mask.astype(jnp.float32), axis=1)                # (B, L)
    i = jnp.arange(num_feats)
    dim_t = temperature ** (2.0 * (i // 2).astype(jnp.float32) / num_feats)
    pos_x = x_embed[:, :, None] / dim_t                                   # (B, L, H)
    return jnp.where(i % 2 == 0, jnp.sin(pos_x), jnp.cos(pos_x)).astype(jnp.float32)


def forward(params, src_txt, src_txt_mask, src_vid, src_vid_mask):
    B, Lt, _ = src_txt.shape
    _, Lv, _ = src_vid.shape
    H = params["tok_emb"].shape[1]

    # fused input projections (+ token-type embedding), one kernel each
    v = project(src_vid, params["vid_proj"][0], params["vid_proj"][1],
                params["tok_emb"][1][None, :])
    t = project(src_txt, params["txt_proj"][0], params["txt_proj"][1],
                params["tok_emb"][0][None, :])

    src = jnp.concatenate([t, v], axis=1)
    pos_vid = sine_position_embedding(src_vid_mask, H)
    pos = jnp.concatenate([jnp.zeros((B, Lt, H), jnp.float32), pos_vid],
                          axis=1)                             # use_txt_pos=False

    # whole mamba Block stack + trailing norm_f in one pallas_call;
    # hidden/residual are fori_loop carries (VMEM-resident), residual init'd to 0.
    gammas = jnp.concatenate([params["layers_g"], params["norm_f_g"]], axis=0)
    betas = jnp.concatenate([params["layers_b"], params["norm_f_b"]], axis=0)
    hidden = encoder(src, pos, gammas, betas)

    vid_mem = hidden[:, Lt:Lt + Lv, :]

    outputs_class, outputs_coord = prediction_heads(
        vid_mem, params["class_embed"], params["span_embed"])

    vid_mem_proj = v
    txt_mem_proj, sim = pool_and_saliency(t, src_txt_mask, v, src_vid_mask,
                                          params["wpool_w"])

    return dict(
        pred_logits=outputs_class,
        pred_spans=outputs_coord,
        src_vid_mask=src_vid_mask,
        vid_mem_proj=vid_mem_proj,
        txt_mem_proj=txt_mem_proj,
        saliency_scores=sim,
    )


# --------------------------------------------------------------------------
# Example run
# --------------------------------------------------------------------------

if __name__ == "__main__":
    B, Lt, Lv = 2, 8, 16
    txt_dim, vid_dim, hidden, depth = 48, 64, 32, 2

    key = jax.random.PRNGKey(0)
    k_p, k_t, k_v = jax.random.split(key, 3)

    params = make_params(k_p, txt_dim, vid_dim, hidden, depth)

    src_txt = jax.random.normal(k_t, (B, Lt, txt_dim), jnp.float32)
    src_vid = jax.random.normal(k_v, (B, Lv, vid_dim), jnp.float32)
    src_txt_mask = jnp.ones((B, Lt), jnp.float32).at[1, 6:].set(0.0)
    src_vid_mask = jnp.ones((B, Lv), jnp.float32).at[1, 12:].set(0.0)

    out = forward(params, src_txt, src_txt_mask, src_vid, src_vid_mask)
    jax.block_until_ready(out)

    assert out["pred_logits"].shape == (B, Lv, 1)
    assert out["pred_spans"].shape == (B, Lv, 2)
    assert out["txt_mem_proj"].shape == (B, 1, hidden)
    assert out["saliency_scores"].shape == (B, Lv)
    assert bool(jnp.all(jnp.isfinite(out["pred_logits"])))
    assert bool(jnp.all(jnp.isfinite(out["pred_spans"])))
    assert bool(jnp.all(jnp.isfinite(out["txt_mem_proj"])))
    print("KERNEL_OK")
</pallas_src>

<mosaic_0001>
module attributes {stable_mosaic.version = 11 : i64} {
  func.func @_proj_kernel(%arg0: i32, %arg1: memref<32x64xf32, #tpu.memory_space<vmem>>, %arg2: memref<1x64xf32, #tpu.memory_space<vmem>>, %arg3: memref<1x64xf32, #tpu.memory_space<vmem>>, %arg4: memref<64x32xbf16, #tpu.memory_space<vmem>>, %arg5: memref<1x32xf32, #tpu.memory_space<vmem>>, %arg6: memref<1x32xf32, #tpu.memory_space<vmem>>, %arg7: memref<1x32xf32, #tpu.memory_space<vmem>>, %arg8: memref<32x32xbf16, #tpu.memory_space<vmem>>, %arg9: memref<1x32xf32, #tpu.memory_space<vmem>>, %arg10: memref<1x32xf32, #tpu.memory_space<vmem>>, %arg11: memref<32x32xf32, #tpu.memory_space<vmem>>) attributes {dimension_semantics = [#tpu.dimension_semantics<parallel>], iteration_bounds = array<i64: 1>, scalar_prefetch = 0 : i64, scratch_operands = 0 : i64, tpu.core_type = #tpu.core_type<tc>, window_params = [{transform_indices = @transform_0, window_bounds = array<i64: 32, 64>}, {pipeline_mode = #tpu.pipeline_mode<synchronous>, transform_indices = @transform_1, window_bounds = array<i64: 1, 64>}, {pipeline_mode = #tpu.pipeline_mode<synchronous>, transform_indices = @transform_2, window_bounds = array<i64: 1, 64>}, {pipeline_mode = #tpu.pipeline_mode<synchronous>, transform_indices = @transform_3, window_bounds = array<i64: 64, 32>}, {pipeline_mode = #tpu.pipeline_mode<synchronous>, transform_indices = @transform_4, window_bounds = array<i64: 1, 32>}, {pipeline_mode = #tpu.pipeline_mode<synchronous>, transform_indices = @transform_5, window_bounds = array<i64: 1, 32>}, {pipeline_mode = #tpu.pipeline_mode<synchronous>, transform_indices = @transform_6, window_bounds = array<i64: 1, 32>}, {pipeline_mode = #tpu.pipeline_mode<synchronous>, transform_indices = @transform_7, window_bounds = array<i64: 32, 32>}, {pipeline_mode = #tpu.pipeline_mode<synchronous>, transform_indices = @transform_8, window_bounds = array<i64: 1, 32>}, {pipeline_mode = #tpu.pipeline_mode<synchronous>, transform_indices = @transform_9, window_bounds = array<i64: 1, 32>}, {transform_indices = @transform_10, window_bounds = array<i64: 32, 32>}]} {
    %c0 = arith.constant 0 : index
    %c0_0 = arith.constant 0 : index
    %0 = vector.load %arg1[%c0, %c0_0] : memref<32x64xf32, #tpu.memory_space<vmem>>, vector<32x64xf32>
    %c0_1 = arith.constant 0 : index
    %c0_2 = arith.constant 0 : index
    %1 = vector.load %arg2[%c0_1, %c0_2] : memref<1x64xf32, #tpu.memory_space<vmem>>, vector<1x64xf32>
    %c0_3 = arith.constant 0 : index
    %c0_4 = arith.constant 0 : index
    %2 = vector.load %arg3[%c0_3, %c0_4] : memref<1x64xf32, #tpu.memory_space<vmem>>, vector<1x64xf32>
    %cst = arith.constant dense<0.000000e+00> : vector<32xf32>
    %3 = vector.multi_reduction <add>, %0, %cst [1] : vector<32x64xf32> to vector<32xf32>
    %4 = vector.shape_cast %3 : vector<32xf32> to vector<32x1xf32>
    %cst_5 = arith.constant 6.400000e+01 : f32
    %5 = vector.broadcast %cst_5 : f32 to vector<32x1xf32>
    %6 = arith.divf %4, %5 : vector<32x1xf32>
    %7 = vector.broadcast %6 : vector<32x1xf32> to vector<32x64xf32>
    %8 = arith.subf %0, %7 : vector<32x64xf32>
    %9 = arith.mulf %8, %8 : vector<32x64xf32>
    %cst_6 = arith.constant dense<0.000000e+00> : vector<32xf32>
    %10 = vector.multi_reduction <add>, %9, %cst_6 [1] : vector<32x64xf32> to vector<32xf32>
    %11 = vector.shape_cast %10 : vector<32xf32> to vector<32x1xf32>
    %cst_7 = arith.constant 6.400000e+01 : f32
    %12 = vector.broadcast %cst_7 : f32 to vector<32x1xf32>
    %13 = arith.divf %11, %12 : vector<32x1xf32>
    %14 = vector.broadcast %6 : vector<32x1xf32> to vector<32x64xf32>
    %15 = arith.subf %0, %14 : vector<32x64xf32>
    %cst_8 = arith.constant 9.99999974E-6 : f32
    %16 = vector.broadcast %cst_8 : f32 to vector<32x1xf32>
    %17 = arith.addf %13, %16 : vector<32x1xf32>
    %18 = math.rsqrt %17 : vector<32x1xf32>
    %19 = vector.broadcast %18 : vector<32x1xf32> to vector<32x64xf32>
    %20 = arith.mulf %15, %19 : vector<32x64xf32>
    %21 = vector.broadcast %1 : vector<1x64xf32> to vector<32x64xf32>
    %22 = arith.mulf %20, %21 : vector<32x64xf32>
    %23 = vector.broadcast %2 : vector<1x64xf32> to vector<32x64xf32>
    %24 = arith.addf %22, %23 : vector<32x64xf32>
    %25 = arith.truncf %24 : vector<32x64xf32> to vector<32x64xbf16>
    %c0_9 = arith.constant 0 : index
    %c0_10 = arith.constant 0 : index
    %26 = vector.load %arg4[%c0_9, %c0_10] : memref<64x32xbf16, #tpu.memory_space<vmem>>, vector<64x32xbf16>
    %cst_11 = arith.constant dense<0.000000e+00> : vector<32x32xf32>
    %27 = tpu.matmul %25, %26, %cst_11 {dimension_numbers = #tpu.dot_dimension_numbers<[1], [0], [0], [1], [0, 0, 1, 1], [], []>} : vector<32x64xbf16>, vector<64x32xbf16>, vector<32x32xf32> -> vector<32x32xf32>
    %c0_12 = arith.constant 0 : index
    %c0_13 = arith.constant 0 : index
    %28 = vector.load %arg5[%c0_12, %c0_13] : memref<1x32xf32, #tpu.memory_space<vmem>>, vector<1x32xf32>
    %29 = vector.broadcast %28 : vector<1x32xf32> to vector<32x32xf32>
    %30 = arith.addf %27, %29 : vector<32x32xf32>
    %cst_14 = arith.constant 0.000000e+00 : f32
    %31 = vector.broadcast %cst_14 : f32 to vector<32x32xf32>
    %32 = arith.maximumf %30, %31 : vector<32x32xf32>
    %c0_15 = arith.constant 0 : index
    %c0_16 = arith.constant 0 : index
    %33 = vector.load %arg6[%c0_15, %c0_16] : memref<1x32xf32, #tpu.memory_space<vmem>>, vector<1x32xf32>
    %c0_17 = arith.constant 0 : index
    %c0_18 = arith.constant 0 : index
    %34 = vector.load %arg7[%c0_17, %c0_18] : memref<1x32xf32, #tpu.memory_space<vmem>>, vector<1x32xf32>
    %cst_19 = arith.constant dense<0.000000e+00> : vector<32xf32>
    %35 = vector.multi_reduction <add>, %32, %cst_19 [1] : vector<32x32xf32> to vector<32xf32>
    %36 = vector.shape_cast %35 : vector<32xf32> to vector<32x1xf32>
    %cst_20 = arith.constant 3.200000e+01 : f32
    %37 = vector.broadcast %cst_20 : f32 to vector<32x1xf32>
    %38 = arith.divf %36, %37 : vector<32x1xf32>
    %39 = vector.broadcast %38 : vector<32x1xf32> to vector<32x32xf32>
    %40 = arith.subf %32, %39 : vector<32x32xf32>
    %41 = arith.mulf %40, %40 : vector<32x32xf32>
    %cst_21 = arith.constant dense<0.000000e+00> : vector<32xf32>
    %42 = vector.multi_reduction <add>, %41, %cst_21 [1] : vector<32x32xf32> to vector<32xf32>
    %43 = vector.shape_cast %42 : vector<32xf32> to vector<32x1xf32>
    %cst_22 = arith.constant 3.200000e+01 : f32
    %44 = vector.broadcast %cst_22 : f32 to vector<32x1xf32>
    %45 = arith.divf %43, %44 : vector<32x1xf32>
    %46 = vector.broadcast %38 : vector<32x1xf32> to vector<32x32xf32>
    %47 = arith.subf %32, %46 : vector<32x32xf32>
    %cst_23 = arith.constant 9.99999974E-6 : f32
    %48 = vector.broadcast %cst_23 : f32 to vector<32x1xf32>
    %49 = arith.addf %45, %48 : vector<32x1xf32>
    %50 = math.rsqrt %49 : vector<32x1xf32>
    %51 = vector.broadcast %50 : vector<32x1xf32> to vector<32x32xf32>
    %52 = arith.mulf %47, %51 : vector<32x32xf32>
    %53 = vector.broadcast %33 : vector<1x32xf32> to vector<32x32xf32>
    %54 = arith.mulf %52, %53 : vector<32x32xf32>
    %55 = vector.broadcast %34 : vector<1x32xf32> to vector<32x32xf32>
    %56 = arith.addf %54, %55 : vector<32x32xf32>
    %57 = arith.truncf %56 : vector<32x32xf32> to vector<32x32xbf16>
    %c0_24 = arith.constant 0 : index
    %c0_25 = arith.constant 0 : index
    %58 = vector.load %arg8[%c0_24, %c0_25] : memref<32x32xbf16, #tpu.memory_space<vmem>>, vector<32x32xbf16>
    %cst_26 = arith.constant dense<0.000000e+00> : vector<32x32xf32>
    %59 = tpu.matmul %57, %58, %cst_26 {dimension_numbers = #tpu.dot_dimension_numbers<[1], [0], [0], [1], [0, 0, 1, 1], [], []>} : vector<32x32xbf16>, vector<32x32xbf16>, vector<32x32xf32> -> vector<32x32xf32>
    %c0_27 = arith.constant 0 : index
    %c0_28 = arith.constant 0 : index
    %60 = vector.load %arg9[%c0_27, %c0_28] : memref<1x32xf32, #tpu.memory_space<vmem>>, vector<1x32xf32>
    %61 = vector.broadcast %60 : vector<1x32xf32> to vector<32x32xf32>
    %62 = arith.addf %59, %61 : vector<32x32xf32>
    %c0_29 = arith.constant 0 : index
    %c0_30 = arith.constant 0 : index
    %63 = vector.load %arg10[%c0_29, %c0_30] : memref<1x32xf32, #tpu.memory_space<vmem>>, vector<1x32xf32>
    %64 = vector.broadcast %63 : vector<1x32xf32> to vector<32x32xf32>
    %65 = arith.addf %62, %64 : vector<32x32xf32>
    %c0_31 = arith.constant 0 : index
    %c0_32 = arith.constant 0 : index
    %66 = vector.load %arg11[%c0_31, %c0_32] : memref<32x32xf32, #tpu.memory_space<vmem>>, vector<32x32xf32>
    tpu.vector_store %arg11[%c0_31, %c0_32], %65 {strides = array<i32>} : memref<32x32xf32, #tpu.memory_space<vmem>>, vector<32x32xf32>,
    return
  }
  func.func @transform_0(%arg0: i32) -> (i32, i32) {
    %c0_i32 = arith.constant 0 : i32
    %c0_i32_0 = arith.constant 0 : i32
    return %arg0, %c0_i32 : i32, i32
  }
  func.func @transform_1(%arg0: i32) -> (i32, i32) {
    %c0_i32 = arith.constant 0 : i32
    %c0_i32_0 = arith.constant 0 : i32
    %c0_i32_1 = arith.constant 0 : i32
    return %c0_i32, %c0_i32_0 : i32, i32
  }
  func.func @transform_2(%arg0: i32) -> (i32, i32) {
    %c0_i32 = arith.constant 0 : i32
    %c0_i32_0 = arith.constant 0 : i32
    %c0_i32_1 = arith.constant 0 : i32
    return %c0_i32, %c0_i32_0 : i32, i32
  }
  func.func @transform_3(%arg0: i32) -> (i32, i32) {
    %c0_i32 = arith.constant 0 : i32
    %c0_i32_0 = arith.constant 0 : i32
    %c0_i32_1 = arith.constant 0 : i32
    return %c0_i32, %c0_i32_0 : i32, i32
  }
  func.func @transform_4(%arg0: i32) -> (i32, i32) {
    %c0_i32 = arith.constant 0 : i32
    %c0_i32_0 = arith.constant 0 : i32
    %c0_i32_1 = arith.constant 0 : i32
    return %c0_i32, %c0_i32_0 : i32, i32
  }
  func.func @transform_5(%arg0: i32) -> (i32, i32) {
    %c0_i32 = arith.constant 0 : i32
    %c0_i32_0 = arith.constant 0 : i32
    %c0_i32_1 = arith.constant 0 : i32
    return %c0_i32, %c0_i32_0 : i32, i32
  }
  func.func @transform_6(%arg0: i32) -> (i32, i32) {
    %c0_i32 = arith.constant 0 : i32
    %c0_i32_0 = arith.constant 0 : i32
    %c0_i32_1 = arith.constant 0 : i32
    return %c0_i32, %c0_i32_0 : i32, i32
  }
  func.func @transform_7(%arg0: i32) -> (i32, i32) {
    %c0_i32 = arith.constant 0 : i32
    %c0_i32_0 = arith.constant 0 : i32
    %c0_i32_1 = arith.constant 0 : i32
    return %c0_i32, %c0_i32_0 : i32, i32
  }
  func.func @transform_8(%arg0: i32) -> (i32, i32) {
    %c0_i32 = arith.constant 0 : i32
    %c0_i32_0 = arith.constant 0 : i32
    %c0_i32_1 = arith.constant 0 : i32
    return %c0_i32, %c0_i32_0 : i32, i32
  }
  func.func @transform_9(%arg0: i32) -> (i32, i32) {
    %c0_i32 = arith.constant 0 : i32
    %c0_i32_0 = arith.constant 0 : i32
    %c0_i32_1 = arith.constant 0 : i32
    return %c0_i32, %c0_i32_0 : i32, i32
  }
  func.func @transform_10(%arg0: i32) -> (i32, i32) {
    %c0_i32 = arith.constant 0 : i32
    %c0_i32_0 = arith.constant 0 : i32
    return %arg0, %c0_i32 : i32, i32
  }
}

</mosaic_0001>

<llo_original>
// kernel: tpu_custom_call.1
$region0: #{tpu_custom_call.1}
  #allocation0 [shape = 'u32[]', space=smem, size = 0x4, offset = 0x4, fixed_abs, tag = 'smem constant byte address 0x4 - core index']
  #allocation1 [shape = 'u32[144,128]{1,0:T(1,128)}', space=vmem, size = 0x12000, scoped, tag = 'internal scratch']
  %s0 = inlined_call_operand.vmem [shape: f32[32,64], index: 0, kind: input, shape index: {}]
  %s1 = inlined_call_operand.vmem [shape: f32[1,64], index: 1, kind: input, shape index: {}]
  %s2 = inlined_call_operand.vmem [shape: f32[1,64], index: 2, kind: input, shape index: {}]
  %s3 = inlined_call_operand.vmem [shape: bf16[64,32], index: 3, kind: input, shape index: {}]
  %s4 = inlined_call_operand.vmem [shape: f32[1,32], index: 4, kind: input, shape index: {}]
  %s5 = inlined_call_operand.vmem [shape: f32[1,32], index: 5, kind: input, shape index: {}]
  %s6 = inlined_call_operand.vmem [shape: f32[1,32], index: 6, kind: input, shape index: {}]
  %s7 = inlined_call_operand.vmem [shape: bf16[32,32], index: 7, kind: input, shape index: {}]
  %s8 = inlined_call_operand.vmem [shape: f32[1,32], index: 8, kind: input, shape index: {}]
  %s9 = inlined_call_operand.vmem [shape: f32[1,32], index: 9, kind: input, shape index: {}]
  %s10 = inlined_call_operand.hbm [shape: f32[32,32], index: 10, kind: output, shape index: {}]
  %s11 = sld [smem:[#allocation0]]
  $region50: #{tpu_custom_call.1} parent=0
    _
  %s13 = ssub.s32 1, %s11
  %s14 = scalar_select 0, %s13, %s11
  $region1: #{tpu_custom_call.1} parent=0
    #allocation2 [shape = 'u8[16384]{0}', space=vmem, size = 0x4000, scoped, tag = 'output window, operand 0, single buffered']
    #allocation3 [shape = 's32[1]{0}', space=sflag, size = 0x4, scoped, tag = 'scoped memory for tpu_custom_call.1']
    %15 = vsyncpa [#allocation3], 0
    // Predicated region
    $region2: #{tpu_custom_call.1} parent=1 // pred_check
      _
    $region3: #{tpu_custom_call.1} parent=1 // pred_check_branch
      %17 = sbr.rel (0) target = $region5
    $region4: #{tpu_custom_call.1} parent=1 // pred_region
      _
    $region5: #{tpu_custom_call.1} parent=1 // pred_fallthru
      _
    // Predicated region
    $region6: #{tpu_custom_call.1} parent=1 // pred_check
      _
    $region7: #{tpu_custom_call.1} parent=1 // pred_check_branch
      %19 = sbr.rel (0) target = $region9
    $region8: #{tpu_custom_call.1} parent=1 // pred_region
      _
    $region9: #{tpu_custom_call.1} parent=1 // pred_fallthru
      _
    // Predicated region
    $region10: #{tpu_custom_call.1} parent=1 // pred_check
      _
    $region11: #{tpu_custom_call.1} parent=1 // pred_check_branch
      %21 = sbr.rel (0) target = $region13
    $region12: #{tpu_custom_call.1} parent=1 // pred_region
      _
    $region13: #{tpu_custom_call.1} parent=1 // pred_fallthru
      _
    // Predicated region
    $region14: #{tpu_custom_call.1} parent=1 // pred_check
      _
    $region15: #{tpu_custom_call.1} parent=1 // pred_check_branch
      %23 = sbr.rel (0) target = $region17
    $region16: #{tpu_custom_call.1} parent=1 // pred_region
      _
    $region17: #{tpu_custom_call.1} parent=1 // pred_fallthru
      _
    // Predicated region
    $region18: #{tpu_custom_call.1} parent=1 // pred_check
      _
    $region19: #{tpu_custom_call.1} parent=1 // pred_check_branch
      %25 = sbr.rel (0) target = $region21
    $region20: #{tpu_custom_call.1} parent=1 // pred_region
      _
    $region21: #{tpu_custom_call.1} parent=1 // pred_fallthru
      _
    // Predicated region
    $region22: #{tpu_custom_call.1} parent=1 // pred_check
      _
    $region23: #{tpu_custom_call.1} parent=1 // pred_check_branch
      %27 = sbr.rel (0) target = $region25
    $region24: #{tpu_custom_call.1} parent=1 // pred_region
      _
    $region25: #{tpu_custom_call.1} parent=1 // pred_fallthru
      _
    // Predicated region
    $region26: #{tpu_custom_call.1} parent=1 // pred_check
      _
    $region27: #{tpu_custom_call.1} parent=1 // pred_check_branch
      %29 = sbr.rel (0) target = $region29
    $region28: #{tpu_custom_call.1} parent=1 // pred_region
      _
    $region29: #{tpu_custom_call.1} parent=1 // pred_fallthru
      _
    // Predicated region
    $region30: #{tpu_custom_call.1} parent=1 // pred_check
      _
    $region31: #{tpu_custom_call.1} parent=1 // pred_check_branch
      %31 = sbr.rel (0) target = $region33
    $region32: #{tpu_custom_call.1} parent=1 // pred_region
      _
    $region33: #{tpu_custom_call.1} parent=1 // pred_fallthru
      _
    // Predicated region
    $region34: #{tpu_custom_call.1} parent=1 // pred_check
      _
    $region35: #{tpu_custom_call.1} parent=1 // pred_check_branch
      %33 = sbr.rel (0) target = $region37
    $region36: #{tpu_custom_call.1} parent=1 // pred_region
      _
    $region37: #{tpu_custom_call.1} parent=1 // pred_fallthru
      _
    // Predicated region
    $region38: #{tpu_custom_call.1} parent=1 // pred_check
      _
    $region39: #{tpu_custom_call.1} parent=1 // pred_check_branch
      %35 = sbr.rel (0) target = $region41
    $region40: #{tpu_custom_call.1} parent=1 // pred_region
      _
    $region41: #{tpu_custom_call.1} parent=1 // pred_fallthru
      _
    %v37 = vld [vmem:[%s0] sm:$0xff]
    %v38 = vld [vmem:[%s0 + $0x8] sm:$0xff]
    %v39 = vld [vmem:[%s0 + $0x10] sm:$0xff]
    %v40 = vld [vmem:[%s0 + $0x18] sm:$0xff]
    %v41 = vld [vmem:[%s1] sm:$0x1]
    %v42 = vld [vmem:[%s2] sm:$0x1]
    %vm43 = vcmask 523264
    %v44 = vsel %vm43, %v37, 0.0
    %45 = vadd.xlane.f32.xlu0 %v44
    %v46 = vpop.xlane.xlu0 %45
    %v47 = vsel %vm43, %v38, 0.0
    %48 = vadd.xlane.f32.xlu0 %v47
    %v49 = vpop.xlane.xlu0 %48
    %v50 = vsel %vm43, %v39, 0.0
    %51 = vadd.xlane.f32.xlu0 %v50
    %v52 = vpop.xlane.xlu0 %51
    %v53 = vsel %vm43, %v40, 0.0
    %54 = vadd.xlane.f32.xlu0 %v53
    %v55 = vpop.xlane.xlu0 %54
    %v56 = vrcp.pop 64.0
    %v57 = vmul.f32 %v46, %v56
    %v58 = vmul.f32 %v49, %v56
    %v59 = vmul.f32 %v52, %v56
    %v60 = vmul.f32 %v55, %v56
    %v61 = vsub.f32 %v37, %v57
    %v62 = vsub.f32 %v38, %v58
    %v63 = vsub.f32 %v39, %v59
    %v64 = vsub.f32 %v40, %v60
    %v65 = vmul.f32 %v61, %v61
    %v66 = vmul.f32 %v62, %v62
    %v67 = vmul.f32 %v63, %v63
    %v68 = vmul.f32 %v64, %v64
    %v69 = vsel %vm43, %v65, 0.0
    %70 = vadd.xlane.f32.xlu0 %v69
    %v71 = vpop.xlane.xlu0 %70
    %v72 = vsel %vm43, %v66, 0.0
    %73 = vadd.xlane.f32.xlu0 %v72
    %v74 = vpop.xlane.xlu0 %73
    %v75 = vsel %vm43, %v67, 0.0
    %76 = vadd.xlane.f32.xlu0 %v75
    %v77 = vpop.xlane.xlu0 %76
    %v78 = vsel %vm43, %v68, 0.0
    %79 = vadd.xlane.f32.xlu0 %v78
    %v80 = vpop.xlane.xlu0 %79
    %v81 = vmul.f32 %v71, %v56
    %v82 = vmul.f32 %v74, %v56
    %v83 = vmul.f32 %v77, %v56
    %v84 = vmul.f32 %v80, %v56
    %v85 = vadd.f32 %v81, 1e-05
    %v86 = vadd.f32 %v82, 1e-05
    %v87 = vadd.f32 %v83, 1e-05
    %v88 = vadd.f32 %v84, 1e-05
    %v89 = vrsqrt.pop %v85
    %v90 = vrsqrt.pop %v86
    %v91 = vrsqrt.pop %v87
    %v92 = vrsqrt.pop %v88
    %v93 = vmul.f32 %v61, %v89
    %v94 = vmul.f32 %v62, %v90
    %v95 = vmul.f32 %v63, %v91
    %v96 = vmul.f32 %v64, %v92
    %v98 = vlaneseq
    %v99 = vshrl.u32 %v98, 7
    %v100 = vsub.s32 0, %v99
    %v101 = vrot.slane %v41, %v100
    %v103 = vmul.f32 %v93, %v101
    %v104 = vmul.f32 %v94, %v101
    %v105 = vmul.f32 %v95, %v101
    %v106 = vmul.f32 %v96, %v101
    %v108 = vlaneseq
    %v109 = vshrl.u32 %v108, 7
    %v110 = vsub.s32 0, %v109
    %v111 = vrot.slane %v42, %v110
    %v113 = vadd.f32 %v103, %v111
    %v114 = vadd.f32 %v104, %v111
    %v115 = vadd.f32 %v105, %v111
    %v116 = vadd.f32 %v106, %v111
    %v117 = vpack.c.bf16 %v114, %v113
    %v118 = vpack.c.bf16 %v116, %v115
    %v119 = vld [vmem:[%s3] sm:$0xf]
    %v120 = vld [vmem:[%s3 + $0x4] sm:$0xf]
    %v121 = vld [vmem:[%s3 + $0x8] sm:$0xf]
    %v122 = vld [vmem:[%s3 + $0xc] sm:$0xf]
    %v123 = vld [vmem:[%s3 + $0x10] sm:$0xf]
    %v124 = vld [vmem:[%s3 + $0x14] sm:$0xf]
    %v125 = vld [vmem:[%s3 + $0x18] sm:$0xf]
    %v126 = vld [vmem:[%s3 + $0x1c] sm:$0xf]
    %v127 = vld [vmem:[%s4] sm:$0x1]
    %v129 = vlaneseq
    %v130 = vshrl.u32 %v129, 7
    %v131 = vsub.s32 0, %v130
    %v132 = vrot.slane %v127, %v131
    %v142 = vunpack.c.l.b16 %v119
    %v143 = vunpack.c.l.b16 %v120
    %v144 = vunpack.c.l.b16 %v121
    %v145 = vunpack.c.l.b16 %v122
    %v146 = vunpack.c.l.b16 %v123
    %v147 = vunpack.c.l.b16 %v124
    %v148 = vunpack.c.l.b16 %v125
    %v149 = vunpack.c.l.b16 %v126
    %v150 = vpack.c.b16 %v143, %v142
    %v151 = vpack.c.b16 %v145, %v144
    %v152 = vpack.c.b16 %v147, %v146
    %v153 = vpack.c.b16 %v149, %v148
    %v159 = vsel %vm43, %v117, 0
    %v162 = vsel %vm43, %v118, 0
    %164 = vmatprep.subr.bf16.mxu0 0
    %165 = vmatpush1.bf16.msra.mxu0 %v150
    %166 = vmatprep.subr.bf16.mxu0 0
    %167 = vmatpush1.bf16.msra.mxu0 %v151
    %168 = vmatprep.subr.bf16.mxu0 0
    %169 = vmatpush1.bf16.msra.mxu0 %v152
    %170 = vmatprep.subr.bf16.mxu0 0
    %171 = vmatpush1.bf16.msra.mxu0 %v153
    %172 = vmatprep.subr.bf16.mxu0 0
    %173 = vmatpush1.bf16.msra.mxu0 0
    %174 = vmatprep.subr.bf16.mxu0 0
    %175 = vmatpush1.bf16.msra.mxu0 0
    %176 = vmatprep.subr.bf16.mxu0 0
    %177 = vmatpush1.bf16.msra.mxu0 0
    %178 = vmatprep.subr.bf16.mxu0 0
    %179 = vmatpush1.bf16.msra.mxu0 0
    %180 = vmatprep.subr.bf16.mxu0 0
    %181 = vmatpush1.bf16.msra.mxu0 0
    %182 = vmatprep.subr.bf16.mxu0 0
    %183 = vmatpush1.bf16.msra.mxu0 0
    %184 = vmatprep.subr.bf16.mxu0 0
    %185 = vmatpush1.bf16.msra.mxu0 0
    %186 = vmatprep.subr.bf16.mxu0 0
    %187 = vmatpush1.bf16.msra.mxu0 0
    %188 = vmatprep.subr.bf16.mxu0 0
    %189 = vmatpush1.bf16.msra.mxu0 0
    %190 = vmatprep.subr.bf16.mxu0 0
    %191 = vmatpush1.bf16.msra.mxu0 0
    %192 = vmatprep.subr.bf16.mxu0 0
    %193 = vmatpush1.bf16.msra.mxu0 0
    %194 = vmatprep.subr.bf16.mxu0 0
    %195 = vmatpush1.bf16.msra.mxu0 0
    %196 = vmatprep.mubr.bf16.mxu0 0
    %197 = vmatmul.mubr.bf16.gmra.mrb[0].mxu0 %v159
    %v198 = vpop.f32.mrb[0].mxu0
    %v199 = vadd.f32 %v132, %v198
    %v200 = vpop.f32.mrb[0].mxu0
    %v201 = vpop.f32.mrb[0].mxu0
    %v202 = vadd.f32 %v132, %v201
    %v203 = vpop.f32.mrb[0].mxu0
    %204 = vmatprep.mubr.bf16.mxu0 0
    %205 = vmatmul.mubr.bf16.gmra.mrb[0].mxu0 %v162
    %v206 = vpop.f32.mrb[0].mxu0
    %v207 = vadd.f32 %v132, %v206
    %v208 = vpop.f32.mrb[0].mxu0
    %v209 = vpop.f32.mrb[0].mxu0
    %v210 = vadd.f32 %v132, %v209
    %v211 = vpop.f32.mrb[0].mxu0
    %212 = vdwg.mxu0
    %v213 = vmax.f32 %v199, 0.0
    %v214 = vmax.f32 %v202, 0.0
    %v215 = vmax.f32 %v207, 0.0
    %v216 = vmax.f32 %v210, 0.0
    %v217 = vld [vmem:[%s5] sm:$0x1]
    %v218 = vld [vmem:[%s6] sm:$0x1]
    %vm219 = vcmask 261120
    %v220 = vsel %vm219, %v213, 0.0
    %221 = vadd.xlane.f32.xlu0 %v220
    %v222 = vpop.xlane.xlu0 %221
    %v223 = vsel %vm219, %v214, 0.0
    %224 = vadd.xlane.f32.xlu0 %v223
    %v225 = vpop.xlane.xlu0 %224
    %v226 = vsel %vm219, %v215, 0.0
    %227 = vadd.xlane.f32.xlu0 %v226
    %v228 = vpop.xlane.xlu0 %227
    %v229 = vsel %vm219, %v216, 0.0
    %230 = vadd.xlane.f32.xlu0 %v229
    %v231 = vpop.xlane.xlu0 %230
    %v232 = vrcp.pop 32.0
    %v233 = vmul.f32 %v222, %v232
    %v234 = vmul.f32 %v225, %v232
    %v235 = vmul.f32 %v228, %v232
    %v236 = vmul.f32 %v231, %v232
    %v237 = vsub.f32 %v213, %v233
    %v238 = vsub.f32 %v214, %v234
    %v239 = vsub.f32 %v215, %v235
    %v240 = vsub.f32 %v216, %v236
    %v241 = vmul.f32 %v237, %v237
    %v242 = vmul.f32 %v238, %v238
    %v243 = vmul.f32 %v239, %v239
    %v244 = vmul.f32 %v240, %v240
    %v245 = vsel %vm219, %v241, 0.0
    %246 = vadd.xlane.f32.xlu0 %v245
    %v247 = vpop.xlane.xlu0 %246
    %v248 = vsel %vm219, %v242, 0.0
    %249 = vadd.xlane.f32.xlu0 %v248
    %v250 = vpop.xlane.xlu0 %249
    %v251 = vsel %vm219, %v243, 0.0
    %252 = vadd.xlane.f32.xlu0 %v251
    %v253 = vpop.xlane.xlu0 %252
    %v254 = vsel %vm219, %v244, 0.0
    %255 = vadd.xlane.f32.xlu0 %v254
    %v256 = vpop.xlane.xlu0 %255
    %v257 = vmul.f32 %v247, %v232
    %v258 = vmul.f32 %v250, %v232
    %v259 = vmul.f32 %v253, %v232
    %v260 = vmul.f32 %v256, %v232
    %v261 = vadd.f32 %v257, 1e-05
    %v262 = vadd.f32 %v258, 1e-05
    %v263 = vadd.f32 %v259, 1e-05
    %v264 = vadd.f32 %v260, 1e-05
    %v265 = vrsqrt.pop %v261
    %v266 = vrsqrt.pop %v262
    %v267 = vrsqrt.pop %v263
    %v268 = vrsqrt.pop %v264
    %v269 = vmul.f32 %v237, %v265
    %v270 = vmul.f32 %v238, %v266
    %v271 = vmul.f32 %v239, %v267
    %v272 = vmul.f32 %v240, %v268
    %v274 = vlaneseq
    %v275 = vshrl.u32 %v274, 7
    %v276 = vsub.s32 0, %v275
    %v277 = vrot.slane %v217, %v276
    %v279 = vmul.f32 %v269, %v277
    %v280 = vmul.f32 %v270, %v277
    %v281 = vmul.f32 %v271, %v277
    %v282 = vmul.f32 %v272, %v277
    %v284 = vlaneseq
    %v285 = vshrl.u32 %v284, 7
    %v286 = vsub.s32 0, %v285
    %v287 = vrot.slane %v218, %v286
    %v289 = vadd.f32 %v279, %v287
    %v290 = vadd.f32 %v280, %v287
    %v291 = vadd.f32 %v281, %v287
    %v292 = vadd.f32 %v282, %v287
    %v293 = vpack.c.bf16 %v290, %v289
    %v294 = vpack.c.bf16 %v292, %v291
    %v295 = vld [vmem:[%s7] sm:$0xf]
    %v296 = vld [vmem:[%s7 + $0x4] sm:$0xf]
    %v297 = vld [vmem:[%s7 + $0x8] sm:$0xf]
    %v298 = vld [vmem:[%s7 + $0xc] sm:$0xf]
    %v299 = vld [vmem:[%s8] sm:$0x1]
    %v301 = vlaneseq
    %v302 = vshrl.u32 %v301, 7
    %v303 = vsub.s32 0, %v302
    %v304 = vrot.slane %v299, %v303
    %v310 = vunpack.c.l.b16 %v295
    %v311 = vunpack.c.l.b16 %v296
    %v312 = vunpack.c.l.b16 %v297
    %v313 = vunpack.c.l.b16 %v298
    %v314 = vpack.c.b16 %v311, %v310
    %v315 = vpack.c.b16 %v313, %v312
    %v319 = vsel %vm219, %v293, 0
    %v322 = vsel %vm219, %v294, 0
    %324 = vmatprep.subr.bf16.mxu0 0
    %325 = vmatpush1.bf16.msra.mxu0 %v314
    %326 = vmatprep.subr.bf16.mxu0 0
    %327 = vmatpush1.bf16.msra.mxu0 %v315
    %328 = vmatprep.subr.bf16.mxu0 0
    %329 = vmatpush1.bf16.msra.mxu0 0
    %330 = vmatprep.subr.bf16.mxu0 0
    %331 = vmatpush1.bf16.msra.mxu0 0
    %332 = vmatprep.subr.bf16.mxu0 0
    %333 = vmatpush1.bf16.msra.mxu0 0
    %334 = vmatprep.subr.bf16.mxu0 0
    %335 = vmatpush1.bf16.msra.mxu0 0
    %336 = vmatprep.subr.bf16.mxu0 0
    %337 = vmatpush1.bf16.msra.mxu0 0
    %338 = vmatprep.subr.bf16.mxu0 0
    %339 = vmatpush1.bf16.msra.mxu0 0
    %340 = vmatprep.subr.bf16.mxu0 0
    %341 = vmatpush1.bf16.msra.mxu0 0
    %342 = vmatprep.subr.bf16.mxu0 0
    %343 = vmatpush1.bf16.msra.mxu0 0
    %344 = vmatprep.subr.bf16.mxu0 0
    %345 = vmatpush1.bf16.msra.mxu0 0
    %346 = vmatprep.subr.bf16.mxu0 0
    %347 = vmatpush1.bf16.msra.mxu0 0
    %348 = vmatprep.subr.bf16.mxu0 0
    %349 = vmatpush1.bf16.msra.mxu0 0
    %350 = vmatprep.subr.bf16.mxu0 0
    %351 = vmatpush1.bf16.msra.mxu0 0
    %352 = vmatprep.subr.bf16.mxu0 0
    %353 = vmatpush1.bf16.msra.mxu0 0
    %354 = vmatprep.subr.bf16.mxu0 0
    %355 = vmatpush1.bf16.msra.mxu0 0
    %356 = vmatprep.mubr.bf16.mxu0 0
    %357 = vmatmul.mubr.bf16.gmra.mrb[0].mxu0 %v319
    %v358 = vpop.f32.mrb[0].mxu0
    %v359 = vadd.f32 %v304, %v358
    %v360 = vpop.f32.mrb[0].mxu0
    %v361 = vpop.f32.mrb[0].mxu0
    %v362 = vadd.f32 %v304, %v361
    %v363 = vpop.f32.mrb[0].mxu0
    %364 = vmatprep.mubr.bf16.mxu0 0
    %365 = vmatmul.mubr.bf16.gmra.mrb[0].mxu0 %v322
    %v366 = vpop.f32.mrb[0].mxu0
    %v367 = vadd.f32 %v304, %v366
    %v368 = vpop.f32.mrb[0].mxu0
    %v369 = vpop.f32.mrb[0].mxu0
    %v370 = vadd.f32 %v304, %v369
    %v371 = vpop.f32.mrb[0].mxu0
    %372 = vdwg.mxu0
    %v373 = vld [vmem:[%s9] sm:$0x1]
    %v375 = vlaneseq
    %v376 = vshrl.u32 %v375, 7
    %v377 = vsub.s32 0, %v376
    %v378 = vrot.slane %v373, %v377
    %v380 = vadd.f32 %v359, %v378
    %v381 = vadd.f32 %v362, %v378
    %v382 = vadd.f32 %v367, %v378
    %v383 = vadd.f32 %v370, %v378
    %384 = vst.msk [vmem:[#allocation2] sm:$0xff] %vm219, %v380
    %385 = vst.msk [vmem:[#allocation2 + $0x8] sm:$0xff] %vm219, %v381
    %386 = vst.msk [vmem:[#allocation2 + $0x10] sm:$0xff] %vm219, %v382
    %387 = vst.msk [vmem:[#allocation2 + $0x18] sm:$0xff] %vm219, %v383
    // Predicated region
    $region42: #{tpu_custom_call.1} parent=1 // pred_check
      _
    $region43: #{tpu_custom_call.1} parent=1 // pred_check_branch
      %389 = sbr.rel (0) target = $region45
    $region44: #{tpu_custom_call.1} parent=1 // pred_region
      %s391 = ssub.s32 512, 512
      %392 = vsyncadd [#allocation3], %s391
      %s393 = sshll.u32 [#allocation2], 4
      %s394 = int_to_ptr.vmem [resolvable:$true] %s393
      %399 = dma.vmem_to_hbm [thread:$0]  %s394, 512, %s10, [#allocation3], 128, 128, 8
    $region45: #{tpu_custom_call.1} parent=1 // pred_fallthru
      _
    // Predicated region
    $region46: #{tpu_custom_call.1} parent=1 // pred_check
      _
    $region47: #{tpu_custom_call.1} parent=1 // pred_check_branch
      %401 = sbr.rel (0) target = $region49
    $region48: #{tpu_custom_call.1} parent=1 // pred_region
      %402 = dma.done [#allocation3], 512
    $region49: #{tpu_custom_call.1} parent=1 // pred_fallthru
      _
    %403 = vsyncpa [#allocation3], 1

</llo_original>
